<compile_context>
chip_gen: v7x
topology: tpu7x:2x2x1
jax: 0.10.0
libtpu: 0.0.40
codegen_flags: <defaults>
</compile_context>

<pallas_src>
import jax
import jax.numpy as jnp
from jax.experimental import pallas as pl
from jax.experimental.pallas import tpu as pltpu

_LANE = 128
_TARGET_BLOCK_BYTES = 2 << 20  # ~2 MiB per block


def _identity_current_kernel(x_ref, o_ref):
    # Pass-through current: I = x  (elementwise copy through VMEM).
    o_ref[...] = x_ref[...]


def _lane_dense_view(total: int) -> tuple[int, int]:
    """Pick a pad-free (rows, cols) view with a lane-dense (128-multiple) last dim."""
    if total % _LANE == 0:
        cols = _LANE
        max_cols = 4096  # wide enough for large unmasked vst, still tileable
        while cols * 2 <= max_cols and total % (cols * 2) == 0:
            cols *= 2
        return total // cols, cols
    # Ragged fallback (rare for NCHW activations): single full-extent block,
    # which waives the (8, 128) divisibility rule.
    return 1, total


def base_current_generator_forward(x: jax.Array) -> jax.Array:
    """Identity current generator: returns current with same shape/dtype as x."""
    orig_shape = x.shape
    total = x.size
    itemsize = jnp.dtype(x.dtype).itemsize

    rows, cols = _lane_dense_view(total)

    # Sublane packing granularity: 8 rows for 32-bit, 16 for bf16, 32 for int8.
    sublane = max(8, 32 // itemsize)

    # Row tile sized for ~2 MiB blocks; full-extent if the array is small.
    row_bytes = cols * itemsize
    tile_r = max(1, _TARGET_BLOCK_BYTES // row_bytes)
    tile_r = (tile_r // sublane) * sublane
    if tile_r < sublane or tile_r >= rows:
        tile_r = rows  # block == full dim -> (8,128) rule waived

    grid = (pl.cdiv(rows, tile_r),)
    x2d = x.reshape(rows, cols)

    out = pl.pallas_call(
        _identity_current_kernel,
        out_shape=jax.ShapeDtypeStruct((rows, cols), x.dtype),
        grid=grid,
        in_specs=[pl.BlockSpec((tile_r, cols), lambda i: (i, 0))],
        out_specs=pl.BlockSpec((tile_r, cols), lambda i: (i, 0)),
        # Identity: let the output reuse the input HBM buffer when donatable.
        input_output_aliases={0: 0},
        cost_estimate=pl.CostEstimate(
            flops=0, transcendentals=0, bytes_accessed=2 * total * itemsize
        ),
        compiler_params=pltpu.CompilerParams(
            dimension_semantics=("parallel",),  # lets v7x shard rows over its 2 TCs
        ),
    )(x2d)

    return out.reshape(orig_shape)


class BaseCurrentGeneratorPallas:
    """JAX/Pallas mirror of the (abstract) PyTorch BaseCurrentGenerator."""

    def __init__(self) -> None:
        # Base class registers no parameters.
        self._forward = jax.jit(base_current_generator_forward)

    def __call__(self, x: jax.Array) -> jax.Array:
        # Stand-in concrete forward: identity current (see TODO above).
        return self._forward(x)

    def reset(self) -> None:
        # Base class reset is abstract; no state to reset here.
        pass


if __name__ == "__main__":
    key = jax.random.PRNGKey(0)
    x = jax.random.normal(key, (2, 4, 16, 16), dtype=jnp.float32)  # NCHW

    gen = BaseCurrentGeneratorPallas()
    y = gen(x)
    y = jax.block_until_ready(y)

    assert y.shape == x.shape and y.dtype == x.dtype
    assert bool(jnp.allclose(y, x)), "identity current mismatch"
    print("KERNEL_OK")
</pallas_src>

<mosaic_0001>
module attributes {stable_mosaic.version = 11 : i64} {
  func.func @_identity_current_kernel(%arg0: i32, %arg1: memref<1x2048xf32, #tpu.memory_space<vmem>>, %arg2: memref<1x2048xf32, #tpu.memory_space<vmem>>) attributes {dimension_semantics = [#tpu.dimension_semantics<parallel>], iteration_bounds = array<i64: 1>, scalar_prefetch = 0 : i64, scratch_operands = 0 : i64, tpu.core_type = #tpu.core_type<tc>, window_params = [{transform_indices = @transform_0, window_bounds = array<i64: 1, 2048>}, {transform_indices = @transform_1, window_bounds = array<i64: 1, 2048>}]} {
    %c0 = arith.constant 0 : index
    %c0_0 = arith.constant 0 : index
    %0 = vector.load %arg1[%c0, %c0_0] : memref<1x2048xf32, #tpu.memory_space<vmem>>, vector<1x2048xf32>
    %c0_1 = arith.constant 0 : index
    %c0_2 = arith.constant 0 : index
    %1 = vector.load %arg2[%c0_1, %c0_2] : memref<1x2048xf32, #tpu.memory_space<vmem>>, vector<1x2048xf32>
    tpu.vector_store %arg2[%c0_1, %c0_2], %0 {strides = array<i32>} : memref<1x2048xf32, #tpu.memory_space<vmem>>, vector<1x2048xf32>,
    return
  }
  func.func @transform_0(%arg0: i32) -> (i32, i32) {
    %c0_i32 = arith.constant 0 : i32
    %c0_i32_0 = arith.constant 0 : i32
    return %arg0, %c0_i32 : i32, i32
  }
  func.func @transform_1(%arg0: i32) -> (i32, i32) {
    %c0_i32 = arith.constant 0 : i32
    %c0_i32_0 = arith.constant 0 : i32
    return %arg0, %c0_i32 : i32, i32
  }
}

</mosaic_0001>

<llo_original>
// kernel: base_current_generator_forward.1
$region0: #{base_current_generator_forward.1}
  #allocation0 [shape = 'u32[]', space=smem, size = 0x4, offset = 0x4, fixed_abs, tag = 'smem constant byte address 0x4 - core index']
  #allocation1 [shape = 'u32[144,128]{1,0:T(1,128)}', space=vmem, size = 0x12000, scoped, tag = 'internal scratch']
  %s0 = inlined_call_operand.vmem [shape: f32[1,2048], index: 0, kind: input, shape index: {}, may-alias: {0,1}]
  %s1 = inlined_call_operand.vmem [shape: f32[1,2048], index: 1, kind: output, shape index: {}, may-alias: {0,1}]
  %s2 = sld [smem:[#allocation0]]
  $region14: #{base_current_generator_forward.1} parent=0
    _
  %s4 = ssub.s32 1, %s2
  %s5 = scalar_select 0, %s4, %s2
  // Predicated region
  $region2: #{base_current_generator_forward.1} parent=0 // pred_check
    _
  $region3: #{base_current_generator_forward.1} parent=0 // pred_check_branch
    %7 = sbr.rel (0) target = $region5
  $region4: #{base_current_generator_forward.1} parent=0 // pred_region
    _
  $region5: #{base_current_generator_forward.1} parent=0 // pred_fallthru
    _
  %v8 = vld [vmem:[%s0] sm:$0xff]
  %v9 = vld [vmem:[%s0 + $0x8] sm:$0xff]
  %10 = vst [vmem:[%s1] sm:$0xff] %v8
  %11 = vst [vmem:[%s1 + $0x8] sm:$0xff] %v9
  // Predicated region
  $region6: #{base_current_generator_forward.1} parent=0 // pred_check
    _
  $region7: #{base_current_generator_forward.1} parent=0 // pred_check_branch
    %13 = sbr.rel (0) target = $region9
  $region8: #{base_current_generator_forward.1} parent=0 // pred_region
    _
  $region9: #{base_current_generator_forward.1} parent=0 // pred_fallthru
    _
  // Predicated region
  $region10: #{base_current_generator_forward.1} parent=0 // pred_check
    _
  $region11: #{base_current_generator_forward.1} parent=0 // pred_check_branch
    %15 = sbr.rel (0) target = $region13
  $region12: #{base_current_generator_forward.1} parent=0 // pred_region
    _
  $region13: #{base_current_generator_forward.1} parent=0 // pred_fallthru
    _

</llo_original>
